<compile_context>
chip_gen: v5e
topology: v5e:2x2
jax: 0.10.0
libtpu: 0.0.40
codegen_flags: <defaults>
</compile_context>

<pallas_src>
import math

import jax
import jax.numpy as jnp
from jax.experimental import pallas as pl
from jax.experimental.pallas import tpu as pltpu

LN_EPS = 1e-5
_INV_SQRT2 = 1.0 / math.sqrt(2.0)


def _round_up(v, m):
    return pl.cdiv(v, m) * m


def _mlp_kernel(x_ref, g_ref, b_ref, w1_ref, b1_ref, w2_ref, b2_ref, o_ref):
    # x_ref: (tm, D_in) tile of rows.
    x = x_ref[...].astype(jnp.float32)

    # --- LayerNorm over last dim (stats in f32) ---
    mean = jnp.mean(x, axis=-1, keepdims=True)
    xc = x - mean
    var = jnp.mean(xc * xc, axis=-1, keepdims=True)
    xn = xc * jax.lax.rsqrt(var + LN_EPS)
    xn = xn * g_ref[...].astype(jnp.float32) + b_ref[...].astype(jnp.float32)

    # --- Linear 1 (MXU): feed operands in the weight dtype (bf16 recommended),
    #     accumulate in f32.  No f32 upcast of the weights in-kernel. ---
    h = jnp.dot(xn.astype(w1_ref.dtype), w1_ref[...],
                preferred_element_type=jnp.float32)
    h = h + b1_ref[...].astype(jnp.float32)

    # --- GELU (exact erf, matches nn.GELU default), in f32 ---
    h = 0.5 * h * (1.0 + jax.lax.erf(h * _INV_SQRT2))

    # --- Linear 2 (MXU) ---
    o = jnp.dot(h.astype(w2_ref.dtype), w2_ref[...],
                preferred_element_type=jnp.float32)
    o = o + b2_ref[...].astype(jnp.float32)

    o_ref[...] = o.astype(o_ref.dtype)


def _choose_row_tile(m, tm):
    """Pick a row tile: multiple of 8, <= tm, and prefer >= 2 grid steps
    (so the parallel grid axis can be sharded across v7x's 2 TensorCores)."""
    if m <= 8:
        return 8
    tile = min(tm, _round_up(m, 8))
    tile = _round_up(tile, 8)
    if _round_up(m, tile) // tile < 2:
        half = _round_up(pl.cdiv(m, 2), 8)
        tile = max(8, min(tile, half))
    return tile


def _vmem_budget_bytes(tm, d_in, h_out, x_itemsize, w_itemsize, out_itemsize):
    est = 2 * tm * d_in * x_itemsize                     # x tile, double-buffered
    est += 2 * tm * h_out * out_itemsize                 # out tile, double-buffered
    est += 2 * (d_in * h_out + h_out * h_out) * w_itemsize  # resident weights (x2 buf)
    est += 2 * 2 * (d_in + h_out) * 4                    # gamma/beta/b1/b2
    est += tm * (d_in + 2 * h_out) * 4                   # f32 intermediates (xn, h, o)
    # Clamp: at least the 32 MiB default, at most 96 MiB (fits v5e/v6e; on v7x
    # the small per-tile working set stays well under the 64 MiB physical cap).
    return int(min(96 << 20, max(32 << 20, int(est * 1.5))))


def mlp_projector(x, params, *, tm=256):
    """x: (..., D_in). Returns (..., H).  Weights may be f32 or bf16."""
    gamma, beta, w1, b1, w2, b2 = params
    d_in = x.shape[-1]
    h_out = w2.shape[-1]
    lead = x.shape[:-1]
    m = math.prod(lead) if lead else 1
    x2 = x.reshape(m, d_in)

    tile = _choose_row_tile(m, tm)
    m_pad = _round_up(m, tile)
    if m_pad != m:
        x2 = jnp.pad(x2, ((0, m_pad - m), (0, 0)))

    grid = (m_pad // tile,)
    full = lambda i: (0, 0)

    flops = 2 * m_pad * (d_in * h_out + h_out * h_out) + 10 * m_pad * d_in
    transcendentals = m_pad * h_out  # erf
    bytes_accessed = int(
        x2.size * x2.dtype.itemsize
        + m_pad * h_out * x.dtype.itemsize
        + sum(int(p.size) * p.dtype.itemsize for p in params)
    )

    vmem_limit = _vmem_budget_bytes(
        tile, d_in, h_out, x2.dtype.itemsize, w1.dtype.itemsize, x.dtype.itemsize
    )

    out = pl.pallas_call(
        _mlp_kernel,
        out_shape=jax.ShapeDtypeStruct((m_pad, h_out), x.dtype),
        grid_spec=pltpu.PrefetchScalarGridSpec(
            num_scalar_prefetch=0,
            grid=grid,
            in_specs=[
                pl.BlockSpec((tile, d_in), lambda i: (i, 0)),   # x rows
                pl.BlockSpec((1, d_in), full),                  # ln gamma (resident)
                pl.BlockSpec((1, d_in), full),                  # ln beta  (resident)
                pl.BlockSpec((d_in, h_out), full),              # w1       (resident)
                pl.BlockSpec((1, h_out), full),                 # b1       (resident)
                pl.BlockSpec((h_out, h_out), full),             # w2       (resident)
                pl.BlockSpec((1, h_out), full),                 # b2       (resident)
            ],
            out_specs=pl.BlockSpec((tile, h_out), lambda i: (i, 0)),
        ),
        compiler_params=pltpu.CompilerParams(
            dimension_semantics=("parallel",),
            vmem_limit_bytes=vmem_limit,
        ),
        cost_estimate=pl.CostEstimate(
            flops=flops,
            transcendentals=transcendentals,
            bytes_accessed=bytes_accessed,
        ),
    )(x2, gamma, beta, w1, b1, w2, b2)

    if m_pad != m:
        out = out[:m]
    return out.reshape(*lead, h_out)


def init_params(key, vit_hidden_size, downsample_ratio, llm_hidden_size):
    d_in = vit_hidden_size * int(1 / downsample_ratio) ** 2
    h = llm_hidden_size
    k1, k2, k3, k4 = jax.random.split(key, 4)
    # LayerNorm: weight=1, bias=0 (PyTorch default)
    gamma = jnp.ones((1, d_in), jnp.float32)
    beta = jnp.zeros((1, d_in), jnp.float32)
    # Linear layers: kaiming-uniform-ish bounds (PyTorch default range)
    lim1 = 1.0 / math.sqrt(d_in)
    w1 = jax.random.uniform(k1, (d_in, h), jnp.float32, -lim1, lim1)
    b1 = jax.random.uniform(k2, (1, h), jnp.float32, -lim1, lim1)
    lim2 = 1.0 / math.sqrt(h)
    w2 = jax.random.uniform(k3, (h, h), jnp.float32, -lim2, lim2)
    b2 = jax.random.uniform(k4, (1, h), jnp.float32, -lim2, lim2)
    return (gamma, beta, w1, b1, w2, b2)


def cast_matmul_weights(params, dtype):
    """Cast only the GEMM operands (w1, w2) to `dtype`; keep LN params and
    biases in f32 so statistics and bias adds stay full precision."""
    gamma, beta, w1, b1, w2, b2 = params
    return (gamma, beta, w1.astype(dtype), b1, w2.astype(dtype), b2)


def mlp_ref(x, params):
    gamma, beta, w1, b1, w2, b2 = params
    mean = jnp.mean(x, axis=-1, keepdims=True)
    var = jnp.mean((x - mean) ** 2, axis=-1, keepdims=True)
    xn = (x - mean) / jnp.sqrt(var + LN_EPS) * gamma[0] + beta[0]
    h = xn @ w1.astype(jnp.float32) + b1[0]
    h = 0.5 * h * (1.0 + jax.lax.erf(h * _INV_SQRT2))
    return h @ w2.astype(jnp.float32) + b2[0]


if __name__ == "__main__":
    # Small config: vit_hidden_size=32, downsample_ratio=0.5 -> D_in = 32*4 = 128
    vit_hidden_size = 32
    downsample_ratio = 0.5
    llm_hidden_size = 128
    batch, seq = 2, 8

    key = jax.random.PRNGKey(0)
    kx, kp = jax.random.split(key)
    d_in = vit_hidden_size * int(1 / downsample_ratio) ** 2
    x = jax.random.normal(kx, (batch, seq, d_in), jnp.float32)
    params = init_params(kp, vit_hidden_size, downsample_ratio, llm_hidden_size)

    ref = mlp_ref(x, params)

    # 1) f32 weights: bit-for-bit semantics of the PyTorch module, tight check.
    out_f32 = jax.block_until_ready(mlp_projector(x, params, tm=256))
    assert out_f32.shape == (batch, seq, llm_hidden_size)
    assert jnp.allclose(out_f32, ref, atol=1e-4, rtol=1e-4), "f32 mismatch vs reference"

    # 2) bf16 GEMM operands with f32 accumulation (recommended TPU config);
    #    tolerance reflects bf16 weight quantization only.
    params_bf16 = cast_matmul_weights(params, jnp.bfloat16)
    out_bf16 = jax.block_until_ready(mlp_projector(x, params_bf16, tm=256))
    assert out_bf16.shape == (batch, seq, llm_hidden_size)
    assert jnp.allclose(out_bf16, ref, atol=5e-2, rtol=5e-2), "bf16 mismatch vs reference"

    print("KERNEL_OK")
</pallas_src>

<mosaic_0001>
module attributes {stable_mosaic.version = 11 : i64} {
  func.func @_mlp_kernel(%arg0: i32, %arg1: memref<8x128xf32, #tpu.memory_space<vmem>>, %arg2: memref<1x128xf32, #tpu.memory_space<vmem>>, %arg3: memref<1x128xf32, #tpu.memory_space<vmem>>, %arg4: memref<128x128xf32, #tpu.memory_space<vmem>>, %arg5: memref<1x128xf32, #tpu.memory_space<vmem>>, %arg6: memref<128x128xf32, #tpu.memory_space<vmem>>, %arg7: memref<1x128xf32, #tpu.memory_space<vmem>>, %arg8: memref<8x128xf32, #tpu.memory_space<vmem>>) attributes {dimension_semantics = [#tpu.dimension_semantics<parallel>], iteration_bounds = array<i64: 2>, scalar_prefetch = 0 : i64, scratch_operands = 0 : i64, tpu.core_type = #tpu.core_type<tc>, window_params = [{transform_indices = @transform_0, window_bounds = array<i64: 8, 128>}, {pipeline_mode = #tpu.pipeline_mode<synchronous>, transform_indices = @transform_1, window_bounds = array<i64: 1, 128>}, {pipeline_mode = #tpu.pipeline_mode<synchronous>, transform_indices = @transform_2, window_bounds = array<i64: 1, 128>}, {pipeline_mode = #tpu.pipeline_mode<synchronous>, transform_indices = @transform_3, window_bounds = array<i64: 128, 128>}, {pipeline_mode = #tpu.pipeline_mode<synchronous>, transform_indices = @transform_4, window_bounds = array<i64: 1, 128>}, {pipeline_mode = #tpu.pipeline_mode<synchronous>, transform_indices = @transform_5, window_bounds = array<i64: 128, 128>}, {pipeline_mode = #tpu.pipeline_mode<synchronous>, transform_indices = @transform_6, window_bounds = array<i64: 1, 128>}, {transform_indices = @transform_7, window_bounds = array<i64: 8, 128>}]} {
    %c0 = arith.constant 0 : index
    %c0_0 = arith.constant 0 : index
    %0 = vector.load %arg1[%c0, %c0_0] : memref<8x128xf32, #tpu.memory_space<vmem>>, vector<8x128xf32>
    %cst = arith.constant dense<0.000000e+00> : vector<8xf32>
    %1 = vector.multi_reduction <add>, %0, %cst [1] : vector<8x128xf32> to vector<8xf32>
    %2 = vector.shape_cast %1 : vector<8xf32> to vector<8x1xf32>
    %cst_1 = arith.constant 1.280000e+02 : f32
    %3 = vector.broadcast %cst_1 : f32 to vector<8x1xf32>
    %4 = arith.divf %2, %3 : vector<8x1xf32>
    %5 = vector.broadcast %4 : vector<8x1xf32> to vector<8x128xf32>
    %6 = arith.subf %0, %5 : vector<8x128xf32>
    %7 = arith.mulf %6, %6 : vector<8x128xf32>
    %cst_2 = arith.constant dense<0.000000e+00> : vector<8xf32>
    %8 = vector.multi_reduction <add>, %7, %cst_2 [1] : vector<8x128xf32> to vector<8xf32>
    %9 = vector.shape_cast %8 : vector<8xf32> to vector<8x1xf32>
    %cst_3 = arith.constant 1.280000e+02 : f32
    %10 = vector.broadcast %cst_3 : f32 to vector<8x1xf32>
    %11 = arith.divf %9, %10 : vector<8x1xf32>
    %cst_4 = arith.constant 9.99999974E-6 : f32
    %12 = vector.broadcast %cst_4 : f32 to vector<8x1xf32>
    %13 = arith.addf %11, %12 : vector<8x1xf32>
    %14 = math.rsqrt %13 : vector<8x1xf32>
    %15 = vector.broadcast %14 : vector<8x1xf32> to vector<8x128xf32>
    %16 = arith.mulf %6, %15 : vector<8x128xf32>
    %c0_5 = arith.constant 0 : index
    %c0_6 = arith.constant 0 : index
    %17 = vector.load %arg2[%c0_5, %c0_6] : memref<1x128xf32, #tpu.memory_space<vmem>>, vector<1x128xf32>
    %18 = vector.broadcast %17 : vector<1x128xf32> to vector<8x128xf32>
    %19 = arith.mulf %16, %18 : vector<8x128xf32>
    %c0_7 = arith.constant 0 : index
    %c0_8 = arith.constant 0 : index
    %20 = vector.load %arg3[%c0_7, %c0_8] : memref<1x128xf32, #tpu.memory_space<vmem>>, vector<1x128xf32>
    %21 = vector.broadcast %20 : vector<1x128xf32> to vector<8x128xf32>
    %22 = arith.addf %19, %21 : vector<8x128xf32>
    %c0_9 = arith.constant 0 : index
    %c0_10 = arith.constant 0 : index
    %23 = vector.load %arg4[%c0_9, %c0_10] : memref<128x128xf32, #tpu.memory_space<vmem>>, vector<128x128xf32>
    %cst_11 = arith.constant dense<0.000000e+00> : vector<8x128xf32>
    %24 = tpu.matmul %22, %23, %cst_11 {dimension_numbers = #tpu.dot_dimension_numbers<[1], [0], [0], [1], [0, 0, 1, 1], [], []>} : vector<8x128xf32>, vector<128x128xf32>, vector<8x128xf32> -> vector<8x128xf32>
    %c0_12 = arith.constant 0 : index
    %c0_13 = arith.constant 0 : index
    %25 = vector.load %arg5[%c0_12, %c0_13] : memref<1x128xf32, #tpu.memory_space<vmem>>, vector<1x128xf32>
    %26 = vector.broadcast %25 : vector<1x128xf32> to vector<8x128xf32>
    %27 = arith.addf %24, %26 : vector<8x128xf32>
    %cst_14 = arith.constant 5.000000e-01 : f32
    %28 = vector.broadcast %cst_14 : f32 to vector<8x128xf32>
    %29 = arith.mulf %28, %27 : vector<8x128xf32>
    %cst_15 = arith.constant 0.707106769 : f32
    %30 = vector.broadcast %cst_15 : f32 to vector<8x128xf32>
    %31 = arith.mulf %27, %30 : vector<8x128xf32>
    %32 = math.erf %31 : vector<8x128xf32>
    %cst_16 = arith.constant 1.000000e+00 : f32
    %33 = vector.broadcast %cst_16 : f32 to vector<8x128xf32>
    %34 = arith.addf %33, %32 : vector<8x128xf32>
    %35 = arith.mulf %29, %34 : vector<8x128xf32>
    %c0_17 = arith.constant 0 : index
    %c0_18 = arith.constant 0 : index
    %36 = vector.load %arg6[%c0_17, %c0_18] : memref<128x128xf32, #tpu.memory_space<vmem>>, vector<128x128xf32>
    %cst_19 = arith.constant dense<0.000000e+00> : vector<8x128xf32>
    %37 = tpu.matmul %35, %36, %cst_19 {dimension_numbers = #tpu.dot_dimension_numbers<[1], [0], [0], [1], [0, 0, 1, 1], [], []>} : vector<8x128xf32>, vector<128x128xf32>, vector<8x128xf32> -> vector<8x128xf32>
    %c0_20 = arith.constant 0 : index
    %c0_21 = arith.constant 0 : index
    %38 = vector.load %arg7[%c0_20, %c0_21] : memref<1x128xf32, #tpu.memory_space<vmem>>, vector<1x128xf32>
    %39 = vector.broadcast %38 : vector<1x128xf32> to vector<8x128xf32>
    %40 = arith.addf %37, %39 : vector<8x128xf32>
    %c0_22 = arith.constant 0 : index
    %c0_23 = arith.constant 0 : index
    %41 = vector.load %arg8[%c0_22, %c0_23] : memref<8x128xf32, #tpu.memory_space<vmem>>, vector<8x128xf32>
    tpu.vector_store %arg8[%c0_22, %c0_23], %40 {strides = array<i32>} : memref<8x128xf32, #tpu.memory_space<vmem>>, vector<8x128xf32>,
    return
  }
  func.func @transform_0(%arg0: i32) -> (i32, i32) {
    %c0_i32 = arith.constant 0 : i32
    %c0_i32_0 = arith.constant 0 : i32
    return %arg0, %c0_i32 : i32, i32
  }
  func.func @transform_1(%arg0: i32) -> (i32, i32) {
    %c0_i32 = arith.constant 0 : i32
    %c0_i32_0 = arith.constant 0 : i32
    %c0_i32_1 = arith.constant 0 : i32
    return %c0_i32, %c0_i32_0 : i32, i32
  }
  func.func @transform_2(%arg0: i32) -> (i32, i32) {
    %c0_i32 = arith.constant 0 : i32
    %c0_i32_0 = arith.constant 0 : i32
    %c0_i32_1 = arith.constant 0 : i32
    return %c0_i32, %c0_i32_0 : i32, i32
  }
  func.func @transform_3(%arg0: i32) -> (i32, i32) {
    %c0_i32 = arith.constant 0 : i32
    %c0_i32_0 = arith.constant 0 : i32
    %c0_i32_1 = arith.constant 0 : i32
    return %c0_i32, %c0_i32_0 : i32, i32
  }
  func.func @transform_4(%arg0: i32) -> (i32, i32) {
    %c0_i32 = arith.constant 0 : i32
    %c0_i32_0 = arith.constant 0 : i32
    %c0_i32_1 = arith.constant 0 : i32
    return %c0_i32, %c0_i32_0 : i32, i32
  }
  func.func @transform_5(%arg0: i32) -> (i32, i32) {
    %c0_i32 = arith.constant 0 : i32
    %c0_i32_0 = arith.constant 0 : i32
    %c0_i32_1 = arith.constant 0 : i32
    return %c0_i32, %c0_i32_0 : i32, i32
  }
  func.func @transform_6(%arg0: i32) -> (i32, i32) {
    %c0_i32 = arith.constant 0 : i32
    %c0_i32_0 = arith.constant 0 : i32
    %c0_i32_1 = arith.constant 0 : i32
    return %c0_i32, %c0_i32_0 : i32, i32
  }
  func.func @transform_7(%arg0: i32) -> (i32, i32) {
    %c0_i32 = arith.constant 0 : i32
    %c0_i32_0 = arith.constant 0 : i32
    return %arg0, %c0_i32 : i32, i32
  }
}

</mosaic_0001>

<llo_original>
// kernel: tpu_custom_call.1
$region0: #{tpu_custom_call.1}
  #allocation0 [shape = 'u32[]', space=smem, size = 0x4, offset = 0x4, fixed_abs, tag = 'smem constant byte address 0x4 - core index']
  #allocation1 [shape = 'u32[72,128]{1,0:T(1,128)}', space=vmem, size = 0x9000, scoped, tag = 'internal scratch']
  %s0 = inlined_call_operand.hbm [shape: f32[16,128], index: 0, kind: input, shape index: {}]
  %s1 = inlined_call_operand.hbm [shape: f32[1,128], index: 1, kind: input, shape index: {}]
  %s2 = inlined_call_operand.vmem [shape: f32[1,128], index: 2, kind: input, shape index: {}]
  %s3 = inlined_call_operand.hbm [shape: f32[128,128], index: 3, kind: input, shape index: {}]
  %s4 = inlined_call_operand.vmem [shape: f32[1,128], index: 4, kind: input, shape index: {}]
  %s5 = inlined_call_operand.hbm [shape: f32[128,128], index: 5, kind: input, shape index: {}]
  %s6 = inlined_call_operand.vmem [shape: f32[1,128], index: 6, kind: input, shape index: {}]
  %s7 = inlined_call_operand.hbm [shape: f32[16,128], index: 7, kind: output, shape index: {}]
  %s8 = sld [smem:[#allocation0]]
  $region77: #{tpu_custom_call.1} parent=0
    _
  %s10 = ssub.s32 1, %s8
  %s11 = scalar_select 0, %s10, %s8
  $region1: #{tpu_custom_call.1} parent=0
    #allocation2 [shape = 'u8[8192]{0}', space=vmem, size = 0x2000, scoped, tag = 'input window, operand 0']
    #allocation3 [shape = 's32[2]{0}', space=sflag, size = 0x8, scoped, tag = 'scoped memory for tpu_custom_call.1']
    #allocation4 [shape = 's32[2]{0}', space=sflag, size = 0x8, scoped, tag = 'scoped memory for tpu_custom_call.1']
    #allocation5 [shape = 'u8[512]{0}', space=vmem, size = 0x400, scoped, tag = 'input window, operand 1, single buffered']
    #allocation6 [shape = 's32[1]{0}', space=sflag, size = 0x4, scoped, tag = 'scoped memory for tpu_custom_call.1']
    #allocation7 [shape = 'u8[65536]{0}', space=vmem, size = 0x10000, scoped, tag = 'input window, operand 3, single buffered']
    #allocation8 [shape = 'u8[65536]{0}', space=vmem, size = 0x10000, scoped, tag = 'input window, operand 5, single buffered']
    #allocation9 [shape = 's32[1]{0}', space=sflag, size = 0x4, scoped, tag = 'scoped memory for tpu_custom_call.1']
    #allocation10 [shape = 'u8[8192]{0}', space=vmem, size = 0x2000, scoped, tag = 'output window, operand 0']
    %12 = vsyncpa [#allocation3], 0
    %s13 = scalar_lea.sflag [#allocation3], 1
    %14 = vsyncpa %s13, 0
    %15 = vsyncpa [#allocation6], 0
    %16 = vsyncpa [#allocation9], 0
    %17 = vsyncpa [#allocation4], 0
    %s18 = scalar_lea.sflag [#allocation4], 1
    %19 = vsyncpa %s18, 0
    loop: start=0, step=1, limit=4
    $region2: #{tpu_custom_call.1} parent=1 // loop_pre_header
      _
    $region3: #{tpu_custom_call.1} parent=1 // loop_header
      %s21 = sphi 0, %s25
      %p22 = scmp.ge.s32.totalorder %s21, 4
      %s31 = sphi 0, %s33
      %s34 = sphi 0, %s31
      %s35 = sphi 0, %s34
      %s51 = sphi 0, %s35
      %s55 = sphi 0, %s55
      %s57 = sphi 0, %s55
      %s58 = sphi 0, %s57
      %s72 = sphi 0, %s58
      %s76 = sphi 0, %s76
      %s78 = sphi 0, %s76
      %s79 = sphi 0, %s78
      %s93 = sphi 0, %s79
      %s97 = sphi 0, %s97
      %s99 = sphi 0, %s97
      %s100 = sphi 0, %s99
      %s114 = sphi 0, %s100
      %s118 = sphi 0, %s118
      %s120 = sphi 0, %s118
      %s121 = sphi 0, %s120
      %s135 = sphi 0, %s121
      %s139 = sphi 0, %s139
      %s141 = sphi 0, %s139
      %s142 = sphi 0, %s141
      %s156 = sphi 0, %s142
      %s160 = sphi 0, %s160
      %s162 = sphi 0, %s160
      %s163 = sphi 0, %s162
      %s177 = sphi 0, %s163
      %s183 = sphi 0, %s185
      %s186 = sphi 0, %s183
      %s187 = sphi 0, %s186
      %s203 = sphi 0, %s187
    $region4: #{tpu_custom_call.1} parent=1 // loop_header_branch
      %24 = sbr.rel (%p22) target = $region8
    $region5: #{tpu_custom_call.1} parent=1 // loop_body
      %s26 = ssub.s32 %s21, 1
      %s27 = ssub.s32 %s21, 2
      %s28 = sadd.s32 %s21, 1
      %s29 = ssub.s32 %s21, %s28
      %p30 = scmp.eq.s32.totalorder %s29, 0
      %s32 = sadd.s32 %s31, 1
      %s33 = scalar_select %p30, %s31, %s32
      %p36 = pneg %p30
      %p37 = scmp.eq.s32.totalorder %s21, 1
      %p38 = por %p36, %p37
      %p39 = scmp.ne.s32.totalorder %s31, %s34
      %p40 = scmp.eq.s32.totalorder %s21, 0
      %p41 = por %p39, %p40
      %p42 = scmp.ne.s32.totalorder %s31, %s34
      %p43 = scmp.eq.s32.totalorder %s26, 1
      %p44 = por %p42, %p43
      %p45 = scmp.ne.s32.totalorder %s34, %s35
      %p46 = scmp.eq.s32.totalorder %s26, 0
      %p47 = por %p45, %p46
      %p48 = scmp.ne.s32.totalorder %s34, %s35
      %p49 = scmp.eq.s32.totalorder %s27, 1
      %p50 = por %p48, %p49
      %p52 = scmp.ne.s32.totalorder %s35, %s51
      %p53 = scmp.eq.s32.totalorder %s27, 0
      %p54 = por %p52, %p53
      %s56 = sadd.s32 %s55, 1
      %p59 = scmp.eq.s32.totalorder %s21, 1
      %p60 = scmp.ne.s32.totalorder %s55, %s57
      %p61 = scmp.eq.s32.totalorder %s21, 0
      %p62 = por %p60, %p61
      %p63 = scmp.ne.s32.totalorder %s55, %s57
      %p64 = scmp.eq.s32.totalorder %s26, 1
      %p65 = por %p63, %p64
      %p66 = scmp.ne.s32.totalorder %s57, %s58
      %p67 = scmp.eq.s32.totalorder %s26, 0
      %p68 = por %p66, %p67
      %p69 = scmp.ne.s32.totalorder %s57, %s58
      %p70 = scmp.eq.s32.totalorder %s27, 1
      %p71 = por %p69, %p70
      %p73 = scmp.ne.s32.totalorder %s58, %s72
      %p74 = scmp.eq.s32.totalorder %s27, 0
      %p75 = por %p73, %p74
      %s77 = sadd.s32 %s76, 1
      %p80 = scmp.eq.s32.totalorder %s21, 1
      %p81 = scmp.ne.s32.totalorder %s76, %s78
      %p82 = scmp.eq.s32.totalorder %s21, 0
      %p83 = por %p81, %p82
      %p84 = scmp.ne.s32.totalorder %s76, %s78
      %p85 = scmp.eq.s32.totalorder %s26, 1
      %p86 = por %p84, %p85
      %p87 = scmp.ne.s32.totalorder %s78, %s79
      %p88 = scmp.eq.s32.totalorder %s26, 0
      %p89 = por %p87, %p88
      %p90 = scmp.ne.s32.totalorder %s78, %s79
      %p91 = scmp.eq.s32.totalorder %s27, 1
      %p92 = por %p90, %p91
      %p94 = scmp.ne.s32.totalorder %s79, %s93
      %p95 = scmp.eq.s32.totalorder %s27, 0
      %p96 = por %p94, %p95
      %s98 = sadd.s32 %s97, 1
      %p101 = scmp.eq.s32.totalorder %s21, 1
      %p102 = scmp.ne.s32.totalorder %s97, %s99
      %p103 = scmp.eq.s32.totalorder %s21, 0
      %p104 = por %p102, %p103
      %p105 = scmp.ne.s32.totalorder %s97, %s99
      %p106 = scmp.eq.s32.totalorder %s26, 1
      %p107 = por %p105, %p106
      %p108 = scmp.ne.s32.totalorder %s99, %s100
      %p109 = scmp.eq.s32.totalorder %s26, 0
      %p110 = por %p108, %p109
      %p111 = scmp.ne.s32.totalorder %s99, %s100
      %p112 = scmp.eq.s32.totalorder %s27, 1
      %p113 = por %p111, %p112
      %p115 = scmp.ne.s32.totalorder %s100, %s114
      %p116 = scmp.eq.s32.totalorder %s27, 0
      %p117 = por %p115, %p116
      %s119 = sadd.s32 %s118, 1
      %p122 = scmp.eq.s32.totalorder %s21, 1
      %p123 = scmp.ne.s32.totalorder %s118, %s120
      %p124 = scmp.eq.s32.totalorder %s21, 0
      %p125 = por %p123, %p124
      %p126 = scmp.ne.s32.totalorder %s118, %s120
      %p127 = scmp.eq.s32.totalorder %s26, 1
      %p128 = por %p126, %p127
      %p129 = scmp.ne.s32.totalorder %s120, %s121
      %p130 = scmp.eq.s32.totalorder %s26, 0
      %p131 = por %p129, %p130
      %p132 = scmp.ne.s32.totalorder %s120, %s121
      %p133 = scmp.eq.s32.totalorder %s27, 1
      %p134 = por %p132, %p133
      %p136 = scmp.ne.s32.totalorder %s121, %s135
      %p137 = scmp.eq.s32.totalorder %s27, 0
      %p138 = por %p136, %p137
      %s140 = sadd.s32 %s139, 1
      %p143 = scmp.eq.s32.totalorder %s21, 1
      %p144 = scmp.ne.s32.totalorder %s139, %s141
      %p145 = scmp.eq.s32.totalorder %s21, 0
      %p146 = por %p144, %p145
      %p147 = scmp.ne.s32.totalorder %s139, %s141
      %p148 = scmp.eq.s32.totalorder %s26, 1
      %p149 = por %p147, %p148
      %p150 = scmp.ne.s32.totalorder %s141, %s142
      %p151 = scmp.eq.s32.totalorder %s26, 0
      %p152 = por %p150, %p151
      %p153 = scmp.ne.s32.totalorder %s141, %s142
      %p154 = scmp.eq.s32.totalorder %s27, 1
      %p155 = por %p153, %p154
      %p157 = scmp.ne.s32.totalorder %s142, %s156
      %p158 = scmp.eq.s32.totalorder %s27, 0
      %p159 = por %p157, %p158
      %s161 = sadd.s32 %s160, 1
      %p164 = scmp.eq.s32.totalorder %s21, 1
      %p165 = scmp.ne.s32.totalorder %s160, %s162
      %p166 = scmp.eq.s32.totalorder %s21, 0
      %p167 = por %p165, %p166
      %p168 = scmp.ne.s32.totalorder %s160, %s162
      %p169 = scmp.eq.s32.totalorder %s26, 1
      %p170 = por %p168, %p169
      %p171 = scmp.ne.s32.totalorder %s162, %s163
      %p172 = scmp.eq.s32.totalorder %s26, 0
      %p173 = por %p171, %p172
      %p174 = scmp.ne.s32.totalorder %s162, %s163
      %p175 = scmp.eq.s32.totalorder %s27, 1
      %p176 = por %p174, %p175
      %p178 = scmp.ne.s32.totalorder %s163, %s177
      %p179 = scmp.eq.s32.totalorder %s27, 0
      %p180 = por %p178, %p179
      %s181 = ssub.s32 %s21, %s28
      %p182 = scmp.eq.s32.totalorder %s181, 0
      %s184 = sadd.s32 %s183, 1
      %s185 = scalar_select %p182, %s183, %s184
      %p188 = pneg %p182
      %p189 = scmp.eq.s32.totalorder %s21, 1
      %p190 = por %p188, %p189
      %p191 = scmp.ne.s32.totalorder %s183, %s186
      %p192 = scmp.eq.s32.totalorder %s21, 0
      %p193 = por %p191, %p192
      %p194 = scmp.ne.s32.totalorder %s183, %s186
      %p195 = scmp.eq.s32.totalorder %s26, 1
      %p196 = por %p194, %p195
      %p197 = scmp.ne.s32.totalorder %s186, %s187
      %p198 = scmp.eq.s32.totalorder %s26, 0
      %p199 = por %p197, %p198
      %p200 = scmp.ne.s32.totalorder %s186, %s187
      %p201 = scmp.eq.s32.totalorder %s27, 1
      %p202 = por %p200, %p201
      %p204 = scmp.ne.s32.totalorder %s187, %s203
      %p205 = scmp.eq.s32.totalorder %s27, 0
      %p206 = por %p204, %p205
      %p207 = scmp.le.s32.totalorder 1, %s21
      %p208 = scmp.lt.s32.totalorder %s21, 3
      %p209 = pnand %p207, %p208
      %p210 = pneg %p209
      // Predicated region
      $region9: #{tpu_custom_call.1} parent=5 // pred_check
        _
      $region10: #{tpu_custom_call.1} parent=5 // pred_check_branch
        %212 = sbr.rel (%p209) target = $region12
      $region11: #{tpu_custom_call.1} parent=5 // pred_region
        %s213 = ssub.s32 %s21, 1
        // Predicated region
        $region13: #{tpu_custom_call.1} parent=11 // pred_check
          %p214 = pneg %p68
        $region14: #{tpu_custom_call.1} parent=11 // pred_check_branch
          %216 = sbr.rel (%p214) target = $region16
        $region15: #{tpu_custom_call.1} parent=11 // pred_region
          %218 = vsyncadd [#allocation6], 0
          %s220 = sshll.u32 %s1, 4
          %s221 = int_to_ptr.hbm [resolvable:$true] %s220
          %s222 = sshll.u32 [#allocation5], 4
          %s223 = int_to_ptr.vmem [resolvable:$true] %s222
          %225 = dma.hbm_to_vmem [thread:$0]  %s221, 16, %s223, [#allocation6]
        $region16: #{tpu_custom_call.1} parent=11 // pred_fallthru
          _
        // Predicated region
        $region17: #{tpu_custom_call.1} parent=11 // pred_check
          %p226 = pneg %p89
        $region18: #{tpu_custom_call.1} parent=11 // pred_check_branch
          %228 = sbr.rel (%p226) target = $region20
        $region19: #{tpu_custom_call.1} parent=11 // pred_region
          _
        $region20: #{tpu_custom_call.1} parent=11 // pred_fallthru
          _
        // Predicated region
        $region21: #{tpu_custom_call.1} parent=11 // pred_check
          %p229 = pneg %p110
        $region22: #{tpu_custom_call.1} parent=11 // pred_check_branch
          %231 = sbr.rel (%p229) target = $region24
        $region23: #{tpu_custom_call.1} parent=11 // pred_region
          %233 = vsyncadd [#allocation6], 0
          %s234 = sshll.u32 %s3, 4
          %s235 = int_to_ptr.hbm [resolvable:$true] %s234
          %s236 = sshll.u32 [#allocation7], 4
          %s237 = int_to_ptr.vmem [resolvable:$true] %s236
          %242 = dma.hbm_to_vmem [thread:$0]  %s235, 2048, %s237, [#allocation6], 128, 128, 8
        $region24: #{tpu_custom_call.1} parent=11 // pred_fallthru
          _
        // Predicated region
        $region25: #{tpu_custom_call.1} parent=11 // pred_check
          %p243 = pneg %p131
        $region26: #{tpu_custom_call.1} parent=11 // pred_check_branch
          %245 = sbr.rel (%p243) target = $region28
        $region27: #{tpu_custom_call.1} parent=11 // pred_region
          _
        $region28: #{tpu_custom_call.1} parent=11 // pred_fallthru
          _
        // Predicated region
        $region29: #{tpu_custom_call.1} parent=11 // pred_check
          %p246 = pneg %p152
        $region30: #{tpu_custom_call.1} parent=11 // pred_check_branch
          %248 = sbr.rel (%p246) target = $region32
        $region31: #{tpu_custom_call.1} parent=11 // pred_region
          %250 = vsyncadd [#allocation9], 0
          %s251 = sshll.u32 %s5, 4
          %s252 = int_to_ptr.hbm [resolvable:$true] %s251
          %s253 = sshll.u32 [#allocation8], 4
          %s254 = int_to_ptr.vmem [resolvable:$true] %s253
          %259 = dma.hbm_to_vmem [thread:$0]  %s252, 2048, %s254, [#allocation9], 128, 128, 8
        $region32: #{tpu_custom_call.1} parent=11 // pred_fallthru
          _
        // Predicated region
        $region33: #{tpu_custom_call.1} parent=11 // pred_check
          %p260 = pneg %p173
        $region34: #{tpu_custom_call.1} parent=11 // pred_check_branch
          %262 = sbr.rel (%p260) target = $region36
        $region35: #{tpu_custom_call.1} parent=11 // pred_region
          _
        $region36: #{tpu_custom_call.1} parent=11 // pred_fallthru
          _
      $region12: #{tpu_custom_call.1} parent=5 // pred_fallthru
        _
      %p263 = scmp.lt.s32.totalorder %s21, 2
      // Predicated region
      $region37: #{tpu_custom_call.1} parent=5 // pred_check
        %p264 = pneg %p263
      $region38: #{tpu_custom_call.1} parent=5 // pred_check_branch
        %266 = sbr.rel (%p264) target = $region40
      $region39: #{tpu_custom_call.1} parent=5 // pred_region
        // Predicated region
        $region41: #{tpu_custom_call.1} parent=39 // pred_check
          %p267 = pneg %p41
        $region42: #{tpu_custom_call.1} parent=39 // pred_check_branch
          %269 = sbr.rel (%p267) target = $region44
        $region43: #{tpu_custom_call.1} parent=39 // pred_region
          %s270 = sand.u32 %s31, 1
          %s271 = scalar_lea.sflag [#allocation3], %s270
          %s272 = sand.u32 %s31, 1
          %s273 = smul.addr %s272, 8
          %s274 = scalar_lea.vmem [#allocation2], %s273
          %276 = vsyncadd %s271, 0
          %s277 = smul.addr %s21, 8
          %s278 = scalar_lea.hbm %s0, %s277
          %s280 = sshll.u32 %s278, 4
          %s281 = int_to_ptr.hbm [resolvable:$true] %s280
          %s282 = sshll.u32 %s274, 4
          %s283 = int_to_ptr.vmem [resolvable:$true] %s282
          %285 = dma.hbm_to_vmem [thread:$0]  %s281, 128, %s283, %s271
        $region44: #{tpu_custom_call.1} parent=39 // pred_fallthru
          _
      $region40: #{tpu_custom_call.1} parent=5 // pred_fallthru
        _
      %p286 = scmp.le.s32.totalorder 1, %s21
      %p287 = scmp.lt.s32.totalorder %s21, 3
      %p288 = pnand %p286, %p287
      %p289 = pneg %p288
      // Predicated region
      $region45: #{tpu_custom_call.1} parent=5 // pred_check
        _
      $region46: #{tpu_custom_call.1} parent=5 // pred_check_branch
        %291 = sbr.rel (%p288) target = $region48
      $region47: #{tpu_custom_call.1} parent=5 // pred_region
        %s292 = ssub.s32 %s21, 1
        %s293 = sand.u32 %s34, 1
        %s294 = scalar_lea.sflag [#allocation3], %s293
        %s295 = sand.u32 %s34, 1
        %s296 = smul.addr %s295, 8
        %s297 = scalar_lea.vmem [#allocation2], %s296
        // Predicated region
        $region49: #{tpu_custom_call.1} parent=47 // pred_check
          %p298 = pneg %p47
        $region50: #{tpu_custom_call.1} parent=47 // pred_check_branch
          %300 = sbr.rel (%p298) target = $region52
        $region51: #{tpu_custom_call.1} parent=47 // pred_region
          %302 = dma.done %s294, 128
        $region52: #{tpu_custom_call.1} parent=47 // pred_fallthru
          _
        // Predicated region
        $region53: #{tpu_custom_call.1} parent=47 // pred_check
          %p303 = pneg %p68
        $region54: #{tpu_custom_call.1} parent=47 // pred_check_branch
          %305 = sbr.rel (%p303) target = $region56
        $region55: #{tpu_custom_call.1} parent=47 // pred_region
          %307 = dma.done [#allocation6], 16
        $region56: #{tpu_custom_call.1} parent=47 // pred_fallthru
          _
        // Predicated region
        $region57: #{tpu_custom_call.1} parent=47 // pred_check
          %p308 = pneg %p110
        $region58: #{tpu_custom_call.1} parent=47 // pred_check_branch
          %310 = sbr.rel (%p308) target = $region60
        $region59: #{tpu_custom_call.1} parent=47 // pred_region
          %312 = dma.done [#allocation6], 2048
        $region60: #{tpu_custom_call.1} parent=47 // pred_fallthru
          _
        // Predicated region
        $region61: #{tpu_custom_call.1} parent=47 // pred_check
          %p313 = pneg %p152
        $region62: #{tpu_custom_call.1} parent=47 // pred_check_branch
          %315 = sbr.rel (%p313) target = $region64
        $region63: #{tpu_custom_call.1} parent=47 // pred_region
          %317 = dma.done [#allocation9], 2048
        $region64: #{tpu_custom_call.1} parent=47 // pred_fallthru
          _
        %s318 = sand.u32 %s34, 1
        %s319 = scalar_lea.sflag [#allocation3], %s318
        %s320 = sand.u32 %s34, 1
        %s321 = smul.addr %s320, 8
        %s322 = scalar_lea.vmem [#allocation2], %s321
        %p323 = pneg %p47
        %p324 = pneg %p44
        %p325 = pneg %p68
        %p326 = pneg %p65
        %p327 = pneg %p89
        %p328 = pneg %p86
        %p329 = pneg %p110
        %p330 = pneg %p107
        %p331 = pneg %p131
        %p332 = pneg %p128
        %p333 = pneg %p152
        %p334 = pneg %p149
        %p335 = pneg %p173
        %p336 = pneg %p170
        %p337 = pneg %p199
        %p338 = pneg %p196
        %s339 = sand.u32 %s186, 1
        %s340 = scalar_lea.sflag [#allocation4], %s339
        %s341 = sand.u32 %s186, 1
        %s342 = smul.addr %s341, 8
        %s343 = scalar_lea.vmem [#allocation10], %s342
        %v344 = vld [vmem:[%s297] sm:$0xff]
        %345 = vadd.xlane.f32.xlu0 %v344
        %v346 = vpop.xlane.xlu0 %345
        %v347 = vrcp.pop 128.0
        %v348 = vmul.f32 128.0, %v347
        %v349 = vsub.f32 1.0, %v348
        %v350 = vmul.f32 %v347, %v349
        %v351 = vadd.f32 %v347, %v350
        %vm352 = vweird.f32 %v347
        %v353 = vsel %vm352, %v347, %v351
        %v354 = vmul.f32 %v346, %v353
        %v355 = vsub.f32 %v344, %v354
        %v356 = vmul.f32 %v355, %v355
        %357 = vadd.xlane.f32.xlu0 %v356
        %v358 = vpop.xlane.xlu0 %357
        %v359 = vmul.f32 %v358, %v353
        %v360 = vadd.f32 %v359, 1e-05
        %v361 = vrsqrt.pop %v360
        %v362 = vmul.f32 %v361, %v360
        %v363 = vmul.f32 %v362, %v361
        %v364 = vmul.f32 0.5, %v363
        %v365 = vsub.f32 1.5, %v364
        %v366 = vmul.f32 %v361, %v365
        %vm367 = vweird.f32 %v360
        %vm368 = vweird.f32 %v361
        %vm369 = vmor %vm367, %vm368
        %v370 = vsel %vm369, %v361, %v366
        %v371 = vmul.f32 %v355, %v370
        %v372 = vld [vmem:[#allocation5] sm:$0x1]
        %v374 = vperm.slane %v372, 0
        %v376 = vmul.f32 %v371, %v374
        %v377 = vld [vmem:[%s2] sm:$0x1]
        %v379 = vperm.slane %v377, 0
        %v381 = vadd.f32 %v376, %v379
        %v382 = vld [vmem:[#allocation7] sm:$0xff]
        %v383 = vld [vmem:[#allocation7 + $0x8] sm:$0xff]
        %v384 = vld [vmem:[#allocation7 + $0x10] sm:$0xff]
        %v385 = vld [vmem:[#allocation7 + $0x18] sm:$0xff]
        %v386 = vld [vmem:[#allocation7 + $0x20] sm:$0xff]
        %v387 = vld [vmem:[#allocation7 + $0x28] sm:$0xff]
        %v388 = vld [vmem:[#allocation7 + $0x30] sm:$0xff]
        %v389 = vld [vmem:[#allocation7 + $0x38] sm:$0xff]
        %v390 = vld [vmem:[#allocation7 + $0x40] sm:$0xff]
        %v391 = vld [vmem:[#allocation7 + $0x48] sm:$0xff]
        %v392 = vld [vmem:[#allocation7 + $0x50] sm:$0xff]
        %v393 = vld [vmem:[#allocation7 + $0x58] sm:$0xff]
        %v394 = vld [vmem:[#allocation7 + $0x60] sm:$0xff]
        %v395 = vld [vmem:[#allocation7 + $0x68] sm:$0xff]
        %v396 = vld [vmem:[#allocation7 + $0x70] sm:$0xff]
        %v397 = vld [vmem:[#allocation7 + $0x78] sm:$0xff]
        %v398 = vld [vmem:[%s4] sm:$0x1]
        %v400 = vperm.slane %v398, 0
        %402 = vmatpush.msra.mxu0 %v397
        %403 = vmatpush.msra.mxu0 %v396
        %404 = vmatpush.msra.mxu0 %v395
        %405 = vmatpush.msra.mxu0 %v394
        %406 = vmatpush.msra.mxu0 %v393
        %407 = vmatpush.msra.mxu0 %v392
        %408 = vmatpush.msra.mxu0 %v391
        %409 = vmatpush.msra.mxu0 %v390
        %410 = vmatpush.msra.mxu0 %v389
        %411 = vmatpush.msra.mxu0 %v388
        %412 = vmatpush.msra.mxu0 %v387
        %413 = vmatpush.msra.mxu0 %v386
        %414 = vmatpush.msra.mxu0 %v385
        %415 = vmatpush.msra.mxu0 %v384
        %416 = vmatpush.msra.mxu0 %v383
        %417 = vmatpush.msra.mxu0 %v382
        %418 = vmatmul.f32.gmra.mxu0 %v381
        %v419 = vpop.f32.mrf.mxu0
        %v420 = vadd.f32 %v400, %v419
        %421 = vdwg.mxu0
        %v422 = vmul.f32 %v420, 0.5
        %v423 = vmul.f32 %v420, 0.70710677
        %v424 = vmul.f32 %v423, %v423
        %v425 = vmin.f32 16.0, %v424
        %v426 = vmul.f32 %v425, 2.1237322e-06
        %v427 = vadd.f32 %v426, 0.00028619796
        %v428 = vmul.f32 %v425, %v427
        %v429 = vadd.f32 %v428, 0.0036580483
        %v430 = vmul.f32 %v425, %v429
        %v431 = vadd.f32 %v430, 0.05243302
        %v432 = vmul.f32 %v425, %v431
        %v433 = vadd.f32 %v432, 0.18741608
        %v434 = vmul.f32 %v425, %v433
        %v435 = vadd.f32 %v434, 1.1283791
        %v436 = vmul.f32 %v423, %v435
        %v437 = vmul.f32 %v425, 3.8918573e-05
        %v438 = vadd.f32 %v437, 0.001143296
        %v439 = vmul.f32 %v425, %v438
        %v440 = vadd.f32 %v439, 0.014752088
        %v441 = vmul.f32 %v425, %v440
        %v442 = vadd.f32 %v441, 0.112945676
        %v443 = vmul.f32 %v425, %v442
        %v444 = vadd.f32 %v443, 0.4994258
        %v445 = vmul.f32 %v425, %v444
        %v446 = vadd.f32 %v445, 1.0
        %v447 = vrcp.pop %v446
        %v448 = vmul.f32 %v446, %v447
        %v449 = vsub.f32 1.0, %v448
        %v450 = vmul.f32 %v447, %v449
        %v451 = vadd.f32 %v447, %v450
        %vm452 = vweird.f32 %v446
        %vm453 = vweird.f32 %v447
        %vm454 = vmor %vm452, %vm453
        %v455 = vsel %vm454, %v447, %v451
        %v456 = vand.u32 2147483647, %v446
        %vm457 = vcmp.eq.f32.partialorder %v456, 8.507059e+37
        %v458 = vand.u32 %v446, 2147483648
        %v459 = vor.u32 1.1754944e-38, %v458
        %v460 = vsel %vm457, %v459, %v455
        %v461 = vmul.f32 %v436, %v460
        %v462 = vmin.f32 %v461, 1.0
        %v463 = vmax.f32 %v462, -1.0
        %v464 = vadd.f32 %v463, 1.0
        %v465 = vmul.f32 %v422, %v464
        %v466 = vld [vmem:[#allocation8] sm:$0xff]
        %v467 = vld [vmem:[#allocation8 + $0x8] sm:$0xff]
        %v468 = vld [vmem:[#allocation8 + $0x10] sm:$0xff]
        %v469 = vld [vmem:[#allocation8 + $0x18] sm:$0xff]
        %v470 = vld [vmem:[#allocation8 + $0x20] sm:$0xff]
        %v471 = vld [vmem:[#allocation8 + $0x28] sm:$0xff]
        %v472 = vld [vmem:[#allocation8 + $0x30] sm:$0xff]
        %v473 = vld [vmem:[#allocation8 + $0x38] sm:$0xff]
        %v474 = vld [vmem:[#allocation8 + $0x40] sm:$0xff]
        %v475 = vld [vmem:[#allocation8 + $0x48] sm:$0xff]
        %v476 = vld [vmem:[#allocation8 + $0x50] sm:$0xff]
        %v477 = vld [vmem:[#allocation8 + $0x58] sm:$0xff]
        %v478 = vld [vmem:[#allocation8 + $0x60] sm:$0xff]
        %v479 = vld [vmem:[#allocation8 + $0x68] sm:$0xff]
        %v480 = vld [vmem:[#allocation8 + $0x70] sm:$0xff]
        %v481 = vld [vmem:[#allocation8 + $0x78] sm:$0xff]
        %v482 = vld [vmem:[%s6] sm:$0x1]
        %v484 = vperm.slane %v482, 0
        %486 = vmatpush.msra.mxu0 %v481
        %487 = vmatpush.msra.mxu0 %v480
        %488 = vmatpush.msra.mxu0 %v479
        %489 = vmatpush.msra.mxu0 %v478
        %490 = vmatpush.msra.mxu0 %v477
        %491 = vmatpush.msra.mxu0 %v476
        %492 = vmatpush.msra.mxu0 %v475
        %493 = vmatpush.msra.mxu0 %v474
        %494 = vmatpush.msra.mxu0 %v473
        %495 = vmatpush.msra.mxu0 %v472
        %496 = vmatpush.msra.mxu0 %v471
        %497 = vmatpush.msra.mxu0 %v470
        %498 = vmatpush.msra.mxu0 %v469
        %499 = vmatpush.msra.mxu0 %v468
        %500 = vmatpush.msra.mxu0 %v467
        %501 = vmatpush.msra.mxu0 %v466
        %502 = vmatmul.f32.gmra.mxu0 %v465
        %v503 = vpop.f32.mrf.mxu0
        %v504 = vadd.f32 %v484, %v503
        %505 = vdwg.mxu0
        %506 = vst [vmem:[%s343] sm:$0xff] %v504
        %s507 = sand.u32 %s186, 1
        %s508 = scalar_lea.sflag [#allocation4], %s507
        %s509 = sand.u32 %s186, 1
        %s510 = smul.addr %s509, 8
        %s511 = scalar_lea.vmem [#allocation10], %s510
        // Predicated region
        $region65: #{tpu_custom_call.1} parent=47 // pred_check
          %p512 = pneg %p196
        $region66: #{tpu_custom_call.1} parent=47 // pred_check_branch
          %514 = sbr.rel (%p512) target = $region68
        $region67: #{tpu_custom_call.1} parent=47 // pred_region
          %516 = vsyncadd %s508, 0
          %s517 = smul.addr %s26, 8
          %s518 = scalar_lea.hbm %s7, %s517
          %s520 = sshll.u32 %s511, 4
          %s521 = int_to_ptr.vmem [resolvable:$true] %s520
          %s522 = sshll.u32 %s518, 4
          %s523 = int_to_ptr.hbm [resolvable:$true] %s522
          %525 = dma.vmem_to_hbm [thread:$0]  %s521, 128, %s523, %s508
        $region68: #{tpu_custom_call.1} parent=47 // pred_fallthru
          _
      $region48: #{tpu_custom_call.1} parent=5 // pred_fallthru
        _
      %p526 = scmp.le.s32.totalorder 2, %s21
      // Predicated region
      $region69: #{tpu_custom_call.1} parent=5 // pred_check
        %p527 = pneg %p526
      $region70: #{tpu_custom_call.1} parent=5 // pred_check_branch
        %529 = sbr.rel (%p527) target = $region72
      $region71: #{tpu_custom_call.1} parent=5 // pred_region
        %s530 = ssub.s32 %s21, 2
        // Predicated region
        $region73: #{tpu_custom_call.1} parent=71 // pred_check
          %p531 = pneg %p202
        $region74: #{tpu_custom_call.1} parent=71 // pred_check_branch
          %533 = sbr.rel (%p531) target = $region76
        $region75: #{tpu_custom_call.1} parent=71 // pred_region
          %s534 = sand.u32 %s187, 1
          %s535 = scalar_lea.sflag [#allocation4], %s534
          %s536 = sand.u32 %s187, 1
          %s537 = smul.addr %s536, 8
          %s538 = scalar_lea.vmem [#allocation10], %s537
          %540 = dma.done %s535, 128
        $region76: #{tpu_custom_call.1} parent=71 // pred_fallthru
          _
      $region72: #{tpu_custom_call.1} parent=5 // pred_fallthru
        _
    $region6: #{tpu_custom_call.1} parent=1 // loop_footer
      %s25 = sadd.s32 1, %s21
    $region7: #{tpu_custom_call.1} parent=1 // loop_footer_branch
      %20 = sbr.rel target = $region3
    $region8: #{tpu_custom_call.1} parent=1 // loop_exit
      _
    %541 = vsyncpa [#allocation3], 1
    %s542 = scalar_lea.sflag [#allocation3], 1
    %543 = vsyncpa %s542, 1
    %544 = vsyncpa [#allocation6], 1
    %545 = vsyncpa [#allocation9], 1
    %546 = vsyncpa [#allocation4], 1
    %s547 = scalar_lea.sflag [#allocation4], 1
    %548 = vsyncpa %s547, 1

</llo_original>
